<compile_context>
chip_gen: v6e
topology: v6e:2x2x1
jax: 0.10.0
libtpu: 0.0.40
codegen_flags: <defaults>
</compile_context>

<pallas_src>
import jax
import jax.numpy as jnp
from jax.experimental import pallas as pl
from jax.experimental.pallas import tpu as pltpu

H1_PAD = 512        # 400 -> 512 (4 x 128; matches v5e 4x128 MXUs, 2 col passes on v6e/v7x)
H2_PAD = 384        # 300 -> 384 (3 x 128; padding further to 512 adds no MXU benefit)
BLOCK_B_MAX = 1024  # max batch tile; ~7 MiB working set, safe under v5e 16 MiB scoped VMEM
MIN_SPLIT_B = 256   # above this, force >= 2 batch tiles (v7x has 2 TensorCores)


def qvalue_kernel(x_ref, w1_ref, b1_ref, w2_ref, b2_ref, w3_ref, b3_ref, o_ref):
    """One batch tile of: Linear(512p) -> ReLU -> Linear(384p) -> ReLU -> Linear(1)."""
    # Layer 1 — single f32 matmul over the pre-concatenated (obs, actions) input.
    # K = in_features + in_actions (~4): MXU pump-bound, so f32 costs the same
    # vmatmul count as bf16 and skips the VPU casts.
    h1 = jnp.dot(x_ref[...], w1_ref[...], preferred_element_type=jnp.float32)
    h1 = jnp.maximum(h1 + b1_ref[...], 0.0)                        # (bt, 512) f32

    # Layer 2 — the only FLOP-heavy matmul: bf16 inputs, f32 accumulate.
    h2 = jnp.dot(h1.astype(w2_ref.dtype), w2_ref[...],
                 preferred_element_type=jnp.float32)
    h2 = jnp.maximum(h2 + b2_ref[...], 0.0)                        # (bt, 384) f32

    # Layer 3 (out_features = 1) — VPU broadcast-mul + lane reduction (no N=1 MXU
    # matmul), written lane-dense as a (1, bt) row so the writeback is an
    # unmasked full-lane store instead of a strided (bt, 1) column.
    q = jnp.sum(h2 * w3_ref[...], axis=-1) + b3_ref[0, 0]          # (bt,) f32
    o_ref[...] = q[None, :].astype(o_ref.dtype)                    # (1, bt)


def _round_up(x, m):
    return ((x + m - 1) // m) * m


def _choose_tiling(batch):
    """Pick (tile, num_tiles): tile <= BLOCK_B_MAX, minimal batch over-padding,
    >= 2 tiles for mid/large batches (v7x megacore), and lane-aligned (128)
    tiles whenever the grid has more than one step so the (1, bt) output block
    stays a multiple of 128 lanes."""
    if batch <= MIN_SPLIT_B:
        return _round_up(max(batch, 8), 8), 1
    num_tiles = max(2, -(-batch // BLOCK_B_MAX))
    tile = _round_up(-(-batch // num_tiles), 128)
    num_tiles = -(-batch // tile)
    return tile, num_tiles


def prepare_params(params, compute_dtype=jnp.bfloat16):
    """One-time prep: pad hidden dims to MXU-friendly widths (exact under
    zero-pad + ReLU), keep W1 in f32 (tiny K), cast the big W2 to bf16, and
    pre-transpose W3 into a broadcast row."""
    w1, b1, w2, b2, w3, b3 = params
    h1, h2 = w1.shape[1], w2.shape[1]
    w1p = jnp.pad(w1, ((0, 0), (0, H1_PAD - h1))).astype(jnp.float32)      # (F, 512)
    b1p = jnp.pad(b1, ((0, 0), (0, H1_PAD - h1))).astype(jnp.float32)      # (1, 512)
    w2p = jnp.pad(w2, ((0, H1_PAD - h1), (0, H2_PAD - h2))).astype(compute_dtype)  # (512, 384)
    b2p = jnp.pad(b2, ((0, 0), (0, H2_PAD - h2))).astype(jnp.float32)      # (1, 384)
    w3r = jnp.pad(w3.T, ((0, 0), (0, H2_PAD - h2))).astype(jnp.float32)    # (1, 384)
    return w1p, b1p, w2p, b2p, w3r, b3.astype(jnp.float32)


@jax.jit
def state_action_to_qvalue(obs, actions, prepared_params):
    """obs (B, in_features), actions (B, in_actions) -> q-values (B, 1)."""
    w1, b1, w2, b2, w3_row, b3 = prepared_params
    B = obs.shape[0]
    F = obs.shape[1] + actions.shape[1]
    x = jnp.concatenate((obs, actions), axis=1)          # (B, F): fused-concat input

    bt, num_tiles = _choose_tiling(B)
    b_pad = bt * num_tiles
    if b_pad != B:
        x = jnp.pad(x, ((0, b_pad - B), (0, 0)))

    tiled_in = lambda i: (i, 0)       # batch-tiled input
    tiled_out = lambda i: (0, i)      # lane-dense (1, bt) output tiles
    resident = lambda i: (0, 0)       # weights/biases stay VMEM-resident

    flops = 2 * b_pad * (F * H1_PAD + H1_PAD * H2_PAD + H2_PAD)
    bytes_accessed = (int(x.size) * x.dtype.itemsize
                      + sum(int(a.size) * a.dtype.itemsize for a in prepared_params)
                      + b_pad * 4)

    out = pl.pallas_call(
        qvalue_kernel,
        out_shape=jax.ShapeDtypeStruct((1, b_pad), jnp.float32),
        grid=(num_tiles,),
        in_specs=[
            pl.BlockSpec((bt, F), tiled_in),
            pl.BlockSpec(w1.shape, resident),
            pl.BlockSpec(b1.shape, resident),
            pl.BlockSpec(w2.shape, resident),
            pl.BlockSpec(b2.shape, resident),
            pl.BlockSpec(w3_row.shape, resident),
            pl.BlockSpec(b3.shape, resident),
        ],
        out_specs=pl.BlockSpec((1, bt), tiled_out),
        compiler_params=pltpu.CompilerParams(
            dimension_semantics=("parallel",),
            vmem_limit_bytes=32 * 1024 * 1024),
        cost_estimate=pl.CostEstimate(
            flops=flops, transcendentals=0, bytes_accessed=bytes_accessed),
    )(x, w1, b1, w2, b2, w3_row, b3)

    return out[0, :B][:, None]        # (B, 1); padded garbage rows are dropped


def init_params(key, in_features, in_actions):
    """Deterministic init mimicking PyTorch Linear's U(-1/sqrt(fan_in), +).
    Weights stored pre-transposed as (in_features, out_features)."""
    in_f = in_features + in_actions
    sizes = [(in_f, 400), (400, 300), (300, 1)]
    params = []
    for fan_in, fan_out in sizes:
        key, kw, kb = jax.random.split(key, 3)
        bound = 1.0 / jnp.sqrt(float(fan_in))
        w = jax.random.uniform(kw, (fan_in, fan_out), jnp.float32, -bound, bound)
        b = jax.random.uniform(kb, (1, fan_out), jnp.float32, -bound, bound)
        params.extend([w, b])
    return tuple(params)


def reference(obs, actions, prepared_params):
    """Pure-JAX reference mirroring the kernel math (f32 layer 1, bf16 layer 2)."""
    w1, b1, w2, b2, w3_row, b3 = prepared_params
    x = jnp.concatenate((obs, actions), axis=1)
    h1 = jnp.maximum(jnp.dot(x, w1, preferred_element_type=jnp.float32) + b1, 0.0)
    h2 = jnp.maximum(jnp.dot(h1.astype(w2.dtype), w2,
                             preferred_element_type=jnp.float32) + b2, 0.0)
    return jnp.sum(h2 * w3_row, axis=-1, keepdims=True) + b3


if __name__ == "__main__":
    key = jax.random.PRNGKey(0)
    in_features, in_actions, batch = 3, 1, 8   # pendulum: obs dim 3, action dim 1

    k_obs, k_act, k_par = jax.random.split(key, 3)
    obs = jax.random.normal(k_obs, (batch, in_features), jnp.float32)
    actions = jax.random.normal(k_act, (batch, in_actions), jnp.float32)
    params = init_params(k_par, in_features, in_actions)
    prepared = prepare_params(params)

    q = state_action_to_qvalue(obs, actions, prepared)
    q = jax.block_until_ready(q)

    q_ref = reference(obs, actions, prepared)
    assert q.shape == (batch, 1)
    assert jnp.allclose(q, q_ref, atol=1e-3, rtol=1e-3), \
        float(jnp.max(jnp.abs(q - q_ref)))

    print("KERNEL_OK")
</pallas_src>

<mosaic_0001>
module attributes {stable_mosaic.version = 11 : i64} {
  func.func @qvalue_kernel(%arg0: i32, %arg1: memref<8x4xf32, #tpu.memory_space<vmem>>, %arg2: memref<4x512xf32, #tpu.memory_space<vmem>>, %arg3: memref<1x512xf32, #tpu.memory_space<vmem>>, %arg4: memref<512x384xbf16, #tpu.memory_space<vmem>>, %arg5: memref<1x384xf32, #tpu.memory_space<vmem>>, %arg6: memref<1x384xf32, #tpu.memory_space<vmem>>, %arg7: memref<1x1xf32, #tpu.memory_space<vmem>>, %arg8: memref<1x8xf32, #tpu.memory_space<vmem>>) attributes {dimension_semantics = [#tpu.dimension_semantics<parallel>], iteration_bounds = array<i64: 1>, scalar_prefetch = 0 : i64, scratch_operands = 0 : i64, tpu.core_type = #tpu.core_type<tc>, window_params = [{transform_indices = @transform_0, window_bounds = array<i64: 8, 4>}, {pipeline_mode = #tpu.pipeline_mode<synchronous>, transform_indices = @transform_1, window_bounds = array<i64: 4, 512>}, {pipeline_mode = #tpu.pipeline_mode<synchronous>, transform_indices = @transform_2, window_bounds = array<i64: 1, 512>}, {pipeline_mode = #tpu.pipeline_mode<synchronous>, transform_indices = @transform_3, window_bounds = array<i64: 512, 384>}, {pipeline_mode = #tpu.pipeline_mode<synchronous>, transform_indices = @transform_4, window_bounds = array<i64: 1, 384>}, {pipeline_mode = #tpu.pipeline_mode<synchronous>, transform_indices = @transform_5, window_bounds = array<i64: 1, 384>}, {pipeline_mode = #tpu.pipeline_mode<synchronous>, transform_indices = @transform_6, window_bounds = array<i64: 1, 1>}, {transform_indices = @transform_7, window_bounds = array<i64: 1, 8>}]} {
    %c0 = arith.constant 0 : index
    %c0_0 = arith.constant 0 : index
    %0 = vector.load %arg1[%c0, %c0_0] : memref<8x4xf32, #tpu.memory_space<vmem>>, vector<8x4xf32>
    %c0_1 = arith.constant 0 : index
    %c0_2 = arith.constant 0 : index
    %1 = vector.load %arg2[%c0_1, %c0_2] : memref<4x512xf32, #tpu.memory_space<vmem>>, vector<4x512xf32>
    %cst = arith.constant dense<0.000000e+00> : vector<8x512xf32>
    %2 = tpu.matmul %0, %1, %cst {dimension_numbers = #tpu.dot_dimension_numbers<[1], [0], [0], [1], [0, 0, 1, 1], [], []>} : vector<8x4xf32>, vector<4x512xf32>, vector<8x512xf32> -> vector<8x512xf32>
    %c0_3 = arith.constant 0 : index
    %c0_4 = arith.constant 0 : index
    %3 = vector.load %arg3[%c0_3, %c0_4] : memref<1x512xf32, #tpu.memory_space<vmem>>, vector<1x512xf32>
    %4 = vector.broadcast %3 : vector<1x512xf32> to vector<8x512xf32>
    %5 = arith.addf %2, %4 : vector<8x512xf32>
    %cst_5 = arith.constant 0.000000e+00 : f32
    %6 = vector.broadcast %cst_5 : f32 to vector<8x512xf32>
    %7 = arith.maximumf %5, %6 : vector<8x512xf32>
    %8 = arith.truncf %7 : vector<8x512xf32> to vector<8x512xbf16>
    %c0_6 = arith.constant 0 : index
    %c0_7 = arith.constant 0 : index
    %9 = vector.load %arg4[%c0_6, %c0_7] : memref<512x384xbf16, #tpu.memory_space<vmem>>, vector<512x384xbf16>
    %cst_8 = arith.constant dense<0.000000e+00> : vector<8x384xf32>
    %10 = tpu.matmul %8, %9, %cst_8 {dimension_numbers = #tpu.dot_dimension_numbers<[1], [0], [0], [1], [0, 0, 1, 1], [], []>} : vector<8x512xbf16>, vector<512x384xbf16>, vector<8x384xf32> -> vector<8x384xf32>
    %c0_9 = arith.constant 0 : index
    %c0_10 = arith.constant 0 : index
    %11 = vector.load %arg5[%c0_9, %c0_10] : memref<1x384xf32, #tpu.memory_space<vmem>>, vector<1x384xf32>
    %12 = vector.broadcast %11 : vector<1x384xf32> to vector<8x384xf32>
    %13 = arith.addf %10, %12 : vector<8x384xf32>
    %cst_11 = arith.constant 0.000000e+00 : f32
    %14 = vector.broadcast %cst_11 : f32 to vector<8x384xf32>
    %15 = arith.maximumf %13, %14 : vector<8x384xf32>
    %c0_12 = arith.constant 0 : index
    %c0_13 = arith.constant 0 : index
    %16 = vector.load %arg6[%c0_12, %c0_13] : memref<1x384xf32, #tpu.memory_space<vmem>>, vector<1x384xf32>
    %17 = vector.broadcast %16 : vector<1x384xf32> to vector<8x384xf32>
    %18 = arith.mulf %15, %17 : vector<8x384xf32>
    %cst_14 = arith.constant dense<0.000000e+00> : vector<8xf32>
    %19 = vector.multi_reduction <add>, %18, %cst_14 [1] : vector<8x384xf32> to vector<8xf32>
    %c0_15 = arith.constant 0 : index
    %c0_16 = arith.constant 0 : index
    %20 = vector.load %arg7[%c0_15, %c0_16] : memref<1x1xf32, #tpu.memory_space<vmem>>, vector<1x1xf32>
    %21 = vector.extract %20[0, 0] : f32 from vector<1x1xf32>
    %22 = vector.broadcast %21 : f32 to vector<8xf32>
    %23 = arith.addf %19, %22 : vector<8xf32>
    %24 = vector.shape_cast %23 : vector<8xf32> to vector<1x8xf32>
    %c0_17 = arith.constant 0 : index
    %c0_18 = arith.constant 0 : index
    %25 = vector.load %arg8[%c0_17, %c0_18] : memref<1x8xf32, #tpu.memory_space<vmem>>, vector<1x8xf32>
    tpu.vector_store %arg8[%c0_17, %c0_18], %24 {strides = array<i32>} : memref<1x8xf32, #tpu.memory_space<vmem>>, vector<1x8xf32>,
    return
  }
  func.func @transform_0(%arg0: i32) -> (i32, i32) {
    %c0_i32 = arith.constant 0 : i32
    %c0_i32_0 = arith.constant 0 : i32
    return %arg0, %c0_i32 : i32, i32
  }
  func.func @transform_1(%arg0: i32) -> (i32, i32) {
    %c0_i32 = arith.constant 0 : i32
    %c0_i32_0 = arith.constant 0 : i32
    %c0_i32_1 = arith.constant 0 : i32
    return %c0_i32, %c0_i32_0 : i32, i32
  }
  func.func @transform_2(%arg0: i32) -> (i32, i32) {
    %c0_i32 = arith.constant 0 : i32
    %c0_i32_0 = arith.constant 0 : i32
    %c0_i32_1 = arith.constant 0 : i32
    return %c0_i32, %c0_i32_0 : i32, i32
  }
  func.func @transform_3(%arg0: i32) -> (i32, i32) {
    %c0_i32 = arith.constant 0 : i32
    %c0_i32_0 = arith.constant 0 : i32
    %c0_i32_1 = arith.constant 0 : i32
    return %c0_i32, %c0_i32_0 : i32, i32
  }
  func.func @transform_4(%arg0: i32) -> (i32, i32) {
    %c0_i32 = arith.constant 0 : i32
    %c0_i32_0 = arith.constant 0 : i32
    %c0_i32_1 = arith.constant 0 : i32
    return %c0_i32, %c0_i32_0 : i32, i32
  }
  func.func @transform_5(%arg0: i32) -> (i32, i32) {
    %c0_i32 = arith.constant 0 : i32
    %c0_i32_0 = arith.constant 0 : i32
    %c0_i32_1 = arith.constant 0 : i32
    return %c0_i32, %c0_i32_0 : i32, i32
  }
  func.func @transform_6(%arg0: i32) -> (i32, i32) {
    %c0_i32 = arith.constant 0 : i32
    %c0_i32_0 = arith.constant 0 : i32
    %c0_i32_1 = arith.constant 0 : i32
    return %c0_i32, %c0_i32_0 : i32, i32
  }
  func.func @transform_7(%arg0: i32) -> (i32, i32) {
    %c0_i32 = arith.constant 0 : i32
    %c0_i32_0 = arith.constant 0 : i32
    return %c0_i32, %arg0 : i32, i32
  }
}

</mosaic_0001>

<llo_original>
// kernel: state_action_to_qvalue.1
$region0: #{state_action_to_qvalue.1}
  #allocation0 [shape = 'u32[]', space=smem, size = 0x4, offset = 0x4, fixed_abs, tag = 'smem constant byte address 0x4 - core index']
  #allocation1 [shape = 'u32[144,128]{1,0:T(1,128)}', space=vmem, size = 0x12000, scoped, tag = 'internal scratch']
  #allocation2 [shape = 'f32[1,1]{1,0:T(1,128)S(1)}', space=vmem, size = 0x200, scoped, tag = 'scoped memory for state_action_to_qvalue.1']
  %s0 = inlined_call_operand.vmem [shape: f32[8,4], index: 0, kind: input, shape index: {}]
  %s1 = inlined_call_operand.vmem [shape: f32[4,512], index: 1, kind: input, shape index: {}]
  %s2 = inlined_call_operand.vmem [shape: f32[1,512], index: 2, kind: input, shape index: {}]
  %s3 = inlined_call_operand.hbm [shape: bf16[512,384], index: 3, kind: input, shape index: {}]
  %s4 = inlined_call_operand.vmem [shape: f32[1,384], index: 4, kind: input, shape index: {}]
  %s5 = inlined_call_operand.vmem [shape: f32[1,384], index: 5, kind: input, shape index: {}]
  %s6 = inlined_call_operand.<no memory space> [shape: f32[1,1], index: 6, kind: input, shape index: {}]
  %s7 = inlined_call_operand.hbm [shape: f32[1,8], index: 7, kind: output, shape index: {}]
  %s8 = sld [smem:[#allocation0]]
  $region42: #{state_action_to_qvalue.1} parent=0
    _
  %s10 = ssub.s32 1, %s8
  %s11 = scalar_select 0, %s10, %s8
  %v12 = vstv %s6
  %13 = vst [vmem:[#allocation2] sm:$0x1] %v12
  $region1: #{state_action_to_qvalue.1} parent=0
    #allocation3 [shape = 'u8[393216]{0}', space=vmem, size = 0x60000, scoped, tag = 'input window, operand 3, single buffered']
    #allocation4 [shape = 's32[1]{0}', space=sflag, size = 0x4, scoped, tag = 'scoped memory for state_action_to_qvalue.1']
    #allocation5 [shape = 's32[1]{0}', space=sflag, size = 0x4, scoped, tag = 'scoped memory for state_action_to_qvalue.1']
    #allocation6 [shape = 'u8[512]{0}', space=vmem, size = 0x400, scoped, tag = 'output window, operand 0, single buffered']
    %14 = vsyncpa [#allocation4], 0
    %15 = vsyncpa [#allocation5], 0
    // Predicated region
    $region2: #{state_action_to_qvalue.1} parent=1 // pred_check
      _
    $region3: #{state_action_to_qvalue.1} parent=1 // pred_check_branch
      %17 = sbr.rel (0) target = $region5
    $region4: #{state_action_to_qvalue.1} parent=1 // pred_region
      _
    $region5: #{state_action_to_qvalue.1} parent=1 // pred_fallthru
      _
    // Predicated region
    $region6: #{state_action_to_qvalue.1} parent=1 // pred_check
      _
    $region7: #{state_action_to_qvalue.1} parent=1 // pred_check_branch
      %19 = sbr.rel (0) target = $region9
    $region8: #{state_action_to_qvalue.1} parent=1 // pred_region
      _
    $region9: #{state_action_to_qvalue.1} parent=1 // pred_fallthru
      _
    // Predicated region
    $region10: #{state_action_to_qvalue.1} parent=1 // pred_check
      _
    $region11: #{state_action_to_qvalue.1} parent=1 // pred_check_branch
      %21 = sbr.rel (0) target = $region13
    $region12: #{state_action_to_qvalue.1} parent=1 // pred_region
      _
    $region13: #{state_action_to_qvalue.1} parent=1 // pred_fallthru
      _
    // Predicated region
    $region14: #{state_action_to_qvalue.1} parent=1 // pred_check
      _
    $region15: #{state_action_to_qvalue.1} parent=1 // pred_check_branch
      %23 = sbr.rel (0) target = $region17
    $region16: #{state_action_to_qvalue.1} parent=1 // pred_region
      %s25 = ssub.s32 12288, 12288
      %26 = vsyncadd [#allocation4], %s25
      %s27 = sshll.u32 [#allocation3], 4
      %s28 = int_to_ptr.vmem [resolvable:$true] %s27
      %33 = dma.hbm_to_vmem [thread:$0]  %s3, 12288, %s28, [#allocation4], 192, 192, 12
    $region17: #{state_action_to_qvalue.1} parent=1 // pred_fallthru
      _
    // Predicated region
    $region18: #{state_action_to_qvalue.1} parent=1 // pred_check
      _
    $region19: #{state_action_to_qvalue.1} parent=1 // pred_check_branch
      %35 = sbr.rel (0) target = $region21
    $region20: #{state_action_to_qvalue.1} parent=1 // pred_region
      _
    $region21: #{state_action_to_qvalue.1} parent=1 // pred_fallthru
      _
    // Predicated region
    $region22: #{state_action_to_qvalue.1} parent=1 // pred_check
      _
    $region23: #{state_action_to_qvalue.1} parent=1 // pred_check_branch
      %37 = sbr.rel (0) target = $region25
    $region24: #{state_action_to_qvalue.1} parent=1 // pred_region
      _
    $region25: #{state_action_to_qvalue.1} parent=1 // pred_fallthru
      _
    // Predicated region
    $region26: #{state_action_to_qvalue.1} parent=1 // pred_check
      _
    $region27: #{state_action_to_qvalue.1} parent=1 // pred_check_branch
      %39 = sbr.rel (0) target = $region29
    $region28: #{state_action_to_qvalue.1} parent=1 // pred_region
      _
    $region29: #{state_action_to_qvalue.1} parent=1 // pred_fallthru
      _
    // Predicated region
    $region30: #{state_action_to_qvalue.1} parent=1 // pred_check
      _
    $region31: #{state_action_to_qvalue.1} parent=1 // pred_check_branch
      %41 = sbr.rel (0) target = $region33
    $region32: #{state_action_to_qvalue.1} parent=1 // pred_region
      %42 = dma.done [#allocation4], 12288
    $region33: #{state_action_to_qvalue.1} parent=1 // pred_fallthru
      _
    %v44 = vld [vmem:[%s0] sm:$0xff]
    %v45 = vld [vmem:[%s1] sm:$0xff]
    %v46 = vld [vmem:[%s1 + $0x8] sm:$0xff]
    %v47 = vld [vmem:[%s2] sm:$0xf]
    %v49 = vlaneseq
    %v50 = vshrl.u32 %v49, 7
    %v51 = vsub.s32 0, %v50
    %v52 = vrot.slane %v47, %v51
    %v53 = vlaneseq
    %v54 = vshrl.u32 %v53, 7
    %v55 = vsub.s32 1, %v54
    %v56 = vrot.slane %v47, %v55
    %v57 = vlaneseq
    %v58 = vshrl.u32 %v57, 7
    %v59 = vsub.s32 2, %v58
    %v60 = vrot.slane %v47, %v59
    %v61 = vlaneseq
    %v62 = vshrl.u32 %v61, 7
    %v63 = vsub.s32 3, %v62
    %v64 = vrot.slane %v47, %v63
    %v71 = vcombine.high %v45, %v45
    %v72 = vcombine.high %v46, %v46
    %vm73 = vcmask 31744
    %v75 = vsel %vm73, %v44, 0
    %vm77 = vcmask 1043456
    %v78 = vsel %vm77, %v45, 0
    %v80 = vsel %vm77, %v71, 0
    %v82 = vsel %vm77, %v46, 0
    %v84 = vsel %vm77, %v72, 0
    %86 = vmatprep.subr.mxu0 0.0
    %87 = vmatpush1.msra.mxu0 0.0
    %88 = vmatprep.subr.mxu0 0.0
    %89 = vmatpush1.msra.mxu0 0.0
    %90 = vmatprep.subr.mxu0 0.0
    %91 = vmatpush1.msra.mxu0 0.0
    %92 = vmatprep.subr.mxu0 0.0
    %93 = vmatpush1.msra.mxu0 0.0
    %94 = vmatprep.subr.mxu0 0.0
    %95 = vmatpush1.msra.mxu0 0.0
    %96 = vmatprep.subr.mxu0 0.0
    %97 = vmatpush1.msra.mxu0 0.0
    %98 = vmatprep.subr.mxu0 0.0
    %99 = vmatpush1.msra.mxu0 0.0
    %100 = vmatprep.subr.mxu0 0.0
    %101 = vmatpush1.msra.mxu0 0.0
    %102 = vmatprep.subr.mxu0 0.0
    %103 = vmatpush1.msra.mxu0 0.0
    %104 = vmatprep.subr.mxu0 0.0
    %105 = vmatpush1.msra.mxu0 0.0
    %106 = vmatprep.subr.mxu0 0.0
    %107 = vmatpush1.msra.mxu0 0.0
    %108 = vmatprep.subr.mxu0 0.0
    %109 = vmatpush1.msra.mxu0 0.0
    %110 = vmatprep.subr.mxu0 0.0
    %111 = vmatpush1.msra.mxu0 0.0
    %112 = vmatprep.subr.mxu0 0.0
    %113 = vmatpush1.msra.mxu0 0.0
    %114 = vmatprep.subr.mxu0 0.0
    %115 = vmatpush1.msra.mxu0 0.0
    %116 = vmatprep.subr.mxu0 %v80
    %117 = vmatpush1.msra.mxu0 %v78
    %118 = vmatprep.subr.mxu0 0.0
    %119 = vmatpush2.msra.mxu0 0.0
    %120 = vmatprep.subr.mxu0 0.0
    %121 = vmatpush2.msra.mxu0 0.0
    %122 = vmatprep.subr.mxu0 0.0
    %123 = vmatpush2.msra.mxu0 0.0
    %124 = vmatprep.subr.mxu0 0.0
    %125 = vmatpush2.msra.mxu0 0.0
    %126 = vmatprep.subr.mxu0 0.0
    %127 = vmatpush2.msra.mxu0 0.0
    %128 = vmatprep.subr.mxu0 0.0
    %129 = vmatpush2.msra.mxu0 0.0
    %130 = vmatprep.subr.mxu0 0.0
    %131 = vmatpush2.msra.mxu0 0.0
    %132 = vmatprep.subr.mxu0 0.0
    %133 = vmatpush2.msra.mxu0 0.0
    %134 = vmatprep.subr.mxu0 0.0
    %135 = vmatpush2.msra.mxu0 0.0
    %136 = vmatprep.subr.mxu0 0.0
    %137 = vmatpush2.msra.mxu0 0.0
    %138 = vmatprep.subr.mxu0 0.0
    %139 = vmatpush2.msra.mxu0 0.0
    %140 = vmatprep.subr.mxu0 0.0
    %141 = vmatpush2.msra.mxu0 0.0
    %142 = vmatprep.subr.mxu0 0.0
    %143 = vmatpush2.msra.mxu0 0.0
    %144 = vmatprep.subr.mxu0 0.0
    %145 = vmatpush2.msra.mxu0 0.0
    %146 = vmatprep.subr.mxu0 0.0
    %147 = vmatpush2.msra.mxu0 0.0
    %148 = vmatprep.subr.mxu0 0.0
    %149 = vmatpush2.msra.mxu0 0.0
    %150 = vmatprep.mubr.f32.mxu0 0.0
    %151 = vmatmul.mubr.f32.gmra.mxu0 %v75
    %v152 = vpop.f32.mrf.mxu0
    %v153 = vadd.f32 %v52, %v152
    %v154 = vpop.f32.mrf.mxu0
    %v155 = vadd.f32 %v56, %v154
    %156 = vdwg.mxu0
    %157 = vmatprep.subr.mxu0 0.0
    %158 = vmatpush1.msra.mxu0 0.0
    %159 = vmatprep.subr.mxu0 0.0
    %160 = vmatpush1.msra.mxu0 0.0
    %161 = vmatprep.subr.mxu0 0.0
    %162 = vmatpush1.msra.mxu0 0.0
    %163 = vmatprep.subr.mxu0 0.0
    %164 = vmatpush1.msra.mxu0 0.0
    %165 = vmatprep.subr.mxu0 0.0
    %166 = vmatpush1.msra.mxu0 0.0
    %167 = vmatprep.subr.mxu0 0.0
    %168 = vmatpush1.msra.mxu0 0.0
    %169 = vmatprep.subr.mxu0 0.0
    %170 = vmatpush1.msra.mxu0 0.0
    %171 = vmatprep.subr.mxu0 0.0
    %172 = vmatpush1.msra.mxu0 0.0
    %173 = vmatprep.subr.mxu0 0.0
    %174 = vmatpush1.msra.mxu0 0.0
    %175 = vmatprep.subr.mxu0 0.0
    %176 = vmatpush1.msra.mxu0 0.0
    %177 = vmatprep.subr.mxu0 0.0
    %178 = vmatpush1.msra.mxu0 0.0
    %179 = vmatprep.subr.mxu0 0.0
    %180 = vmatpush1.msra.mxu0 0.0
    %181 = vmatprep.subr.mxu0 0.0
    %182 = vmatpush1.msra.mxu0 0.0
    %183 = vmatprep.subr.mxu0 0.0
    %184 = vmatpush1.msra.mxu0 0.0
    %185 = vmatprep.subr.mxu0 0.0
    %186 = vmatpush1.msra.mxu0 0.0
    %187 = vmatprep.subr.mxu0 %v84
    %188 = vmatpush1.msra.mxu0 %v82
    %189 = vmatprep.subr.mxu0 0.0
    %190 = vmatpush2.msra.mxu0 0.0
    %191 = vmatprep.subr.mxu0 0.0
    %192 = vmatpush2.msra.mxu0 0.0
    %193 = vmatprep.subr.mxu0 0.0
    %194 = vmatpush2.msra.mxu0 0.0
    %195 = vmatprep.subr.mxu0 0.0
    %196 = vmatpush2.msra.mxu0 0.0
    %197 = vmatprep.subr.mxu0 0.0
    %198 = vmatpush2.msra.mxu0 0.0
    %199 = vmatprep.subr.mxu0 0.0
    %200 = vmatpush2.msra.mxu0 0.0
    %201 = vmatprep.subr.mxu0 0.0
    %202 = vmatpush2.msra.mxu0 0.0
    %203 = vmatprep.subr.mxu0 0.0
    %204 = vmatpush2.msra.mxu0 0.0
    %205 = vmatprep.subr.mxu0 0.0
    %206 = vmatpush2.msra.mxu0 0.0
    %207 = vmatprep.subr.mxu0 0.0
    %208 = vmatpush2.msra.mxu0 0.0
    %209 = vmatprep.subr.mxu0 0.0
    %210 = vmatpush2.msra.mxu0 0.0
    %211 = vmatprep.subr.mxu0 0.0
    %212 = vmatpush2.msra.mxu0 0.0
    %213 = vmatprep.subr.mxu0 0.0
    %214 = vmatpush2.msra.mxu0 0.0
    %215 = vmatprep.subr.mxu0 0.0
    %216 = vmatpush2.msra.mxu0 0.0
    %217 = vmatprep.subr.mxu0 0.0
    %218 = vmatpush2.msra.mxu0 0.0
    %219 = vmatprep.subr.mxu0 0.0
    %220 = vmatpush2.msra.mxu0 0.0
    %221 = vmatprep.mubr.f32.mxu0 0.0
    %222 = vmatmul.mubr.f32.gmra.mxu0 %v75
    %v223 = vpop.f32.mrf.mxu0
    %v224 = vadd.f32 %v60, %v223
    %v225 = vpop.f32.mrf.mxu0
    %v226 = vadd.f32 %v64, %v225
    %227 = vdwg.mxu0
    %v228 = vmax.f32 %v153, 0.0
    %v229 = vmax.f32 %v155, 0.0
    %v230 = vmax.f32 %v224, 0.0
    %v231 = vmax.f32 %v226, 0.0
    %v232 = vpack.c.bf16 %v228, %v228
    %v233 = vpack.c.bf16 %v229, %v229
    %v234 = vpack.c.bf16 %v230, %v230
    %v235 = vpack.c.bf16 %v231, %v231
    %v236 = vld [vmem:[#allocation3] sm:$0xff]
    %v237 = vld [vmem:[#allocation3 + $0x8] sm:$0xf]
    %v238 = vld [vmem:[#allocation3 + $0xc] sm:$0xff]
    %v239 = vld [vmem:[#allocation3 + $0x14] sm:$0xf]
    %v240 = vld [vmem:[#allocation3 + $0x18] sm:$0xff]
    %v241 = vld [vmem:[#allocation3 + $0x20] sm:$0xf]
    %v242 = vld [vmem:[#allocation3 + $0x24] sm:$0xff]
    %v243 = vld [vmem:[#allocation3 + $0x2c] sm:$0xf]
    %v244 = vld [vmem:[#allocation3 + $0x30] sm:$0xff]
    %v245 = vld [vmem:[#allocation3 + $0x38] sm:$0xf]
    %v246 = vld [vmem:[#allocation3 + $0x3c] sm:$0xff]
    %v247 = vld [vmem:[#allocation3 + $0x44] sm:$0xf]
    %v248 = vld [vmem:[#allocation3 + $0x48] sm:$0xff]
    %v249 = vld [vmem:[#allocation3 + $0x50] sm:$0xf]
    %v250 = vld [vmem:[#allocation3 + $0x54] sm:$0xff]
    %v251 = vld [vmem:[#allocation3 + $0x5c] sm:$0xf]
    %v252 = vld [vmem:[#allocation3 + $0x60] sm:$0xff]
    %v253 = vld [vmem:[#allocation3 + $0x68] sm:$0xf]
    %v254 = vld [vmem:[#allocation3 + $0x6c] sm:$0xff]
    %v255 = vld [vmem:[#allocation3 + $0x74] sm:$0xf]
    %v256 = vld [vmem:[#allocation3 + $0x78] sm:$0xff]
    %v257 = vld [vmem:[#allocation3 + $0x80] sm:$0xf]
    %v258 = vld [vmem:[#allocation3 + $0x84] sm:$0xff]
    %v259 = vld [vmem:[#allocation3 + $0x8c] sm:$0xf]
    %v260 = vld [vmem:[#allocation3 + $0x90] sm:$0xff]
    %v261 = vld [vmem:[#allocation3 + $0x98] sm:$0xf]
    %v262 = vld [vmem:[#allocation3 + $0x9c] sm:$0xff]
    %v263 = vld [vmem:[#allocation3 + $0xa4] sm:$0xf]
    %v264 = vld [vmem:[#allocation3 + $0xa8] sm:$0xff]
    %v265 = vld [vmem:[#allocation3 + $0xb0] sm:$0xf]
    %v266 = vld [vmem:[#allocation3 + $0xb4] sm:$0xff]
    %v267 = vld [vmem:[#allocation3 + $0xbc] sm:$0xf]
    %v268 = vld [vmem:[#allocation3 + $0xc0] sm:$0xff]
    %v269 = vld [vmem:[#allocation3 + $0xc8] sm:$0xf]
    %v270 = vld [vmem:[#allocation3 + $0xcc] sm:$0xff]
    %v271 = vld [vmem:[#allocation3 + $0xd4] sm:$0xf]
    %v272 = vld [vmem:[#allocation3 + $0xd8] sm:$0xff]
    %v273 = vld [vmem:[#allocation3 + $0xe0] sm:$0xf]
    %v274 = vld [vmem:[#allocation3 + $0xe4] sm:$0xff]
    %v275 = vld [vmem:[#allocation3 + $0xec] sm:$0xf]
    %v276 = vld [vmem:[#allocation3 + $0xf0] sm:$0xff]
    %v277 = vld [vmem:[#allocation3 + $0xf8] sm:$0xf]
    %v278 = vld [vmem:[#allocation3 + $0xfc] sm:$0xff]
    %v279 = vld [vmem:[#allocation3 + $0x104] sm:$0xf]
    %v280 = vld [vmem:[#allocation3 + $0x108] sm:$0xff]
    %v281 = vld [vmem:[#allocation3 + $0x110] sm:$0xf]
    %v282 = vld [vmem:[#allocation3 + $0x114] sm:$0xff]
    %v283 = vld [vmem:[#allocation3 + $0x11c] sm:$0xf]
    %v284 = vld [vmem:[#allocation3 + $0x120] sm:$0xff]
    %v285 = vld [vmem:[#allocation3 + $0x128] sm:$0xf]
    %v286 = vld [vmem:[#allocation3 + $0x12c] sm:$0xff]
    %v287 = vld [vmem:[#allocation3 + $0x134] sm:$0xf]
    %v288 = vld [vmem:[#allocation3 + $0x138] sm:$0xff]
    %v289 = vld [vmem:[#allocation3 + $0x140] sm:$0xf]
    %v290 = vld [vmem:[#allocation3 + $0x144] sm:$0xff]
    %v291 = vld [vmem:[#allocation3 + $0x14c] sm:$0xf]
    %v292 = vld [vmem:[#allocation3 + $0x150] sm:$0xff]
    %v293 = vld [vmem:[#allocation3 + $0x158] sm:$0xf]
    %v294 = vld [vmem:[#allocation3 + $0x15c] sm:$0xff]
    %v295 = vld [vmem:[#allocation3 + $0x164] sm:$0xf]
    %v296 = vld [vmem:[#allocation3 + $0x168] sm:$0xff]
    %v297 = vld [vmem:[#allocation3 + $0x170] sm:$0xf]
    %v298 = vld [vmem:[#allocation3 + $0x174] sm:$0xff]
    %v299 = vld [vmem:[#allocation3 + $0x17c] sm:$0xf]
    %v300 = vld [vmem:[#allocation3 + $0x180] sm:$0xff]
    %v301 = vld [vmem:[#allocation3 + $0x188] sm:$0xf]
    %v302 = vld [vmem:[#allocation3 + $0x18c] sm:$0xff]
    %v303 = vld [vmem:[#allocation3 + $0x194] sm:$0xf]
    %v304 = vld [vmem:[#allocation3 + $0x198] sm:$0xff]
    %v305 = vld [vmem:[#allocation3 + $0x1a0] sm:$0xf]
    %v306 = vld [vmem:[#allocation3 + $0x1a4] sm:$0xff]
    %v307 = vld [vmem:[#allocation3 + $0x1ac] sm:$0xf]
    %v308 = vld [vmem:[#allocation3 + $0x1b0] sm:$0xff]
    %v309 = vld [vmem:[#allocation3 + $0x1b8] sm:$0xf]
    %v310 = vld [vmem:[#allocation3 + $0x1bc] sm:$0xff]
    %v311 = vld [vmem:[#allocation3 + $0x1c4] sm:$0xf]
    %v312 = vld [vmem:[#allocation3 + $0x1c8] sm:$0xff]
    %v313 = vld [vmem:[#allocation3 + $0x1d0] sm:$0xf]
    %v314 = vld [vmem:[#allocation3 + $0x1d4] sm:$0xff]
    %v315 = vld [vmem:[#allocation3 + $0x1dc] sm:$0xf]
    %v316 = vld [vmem:[#allocation3 + $0x1e0] sm:$0xff]
    %v317 = vld [vmem:[#allocation3 + $0x1e8] sm:$0xf]
    %v318 = vld [vmem:[#allocation3 + $0x1ec] sm:$0xff]
    %v319 = vld [vmem:[#allocation3 + $0x1f4] sm:$0xf]
    %v320 = vld [vmem:[#allocation3 + $0x1f8] sm:$0xff]
    %v321 = vld [vmem:[#allocation3 + $0x200] sm:$0xf]
    %v322 = vld [vmem:[#allocation3 + $0x204] sm:$0xff]
    %v323 = vld [vmem:[#allocation3 + $0x20c] sm:$0xf]
    %v324 = vld [vmem:[#allocation3 + $0x210] sm:$0xff]
    %v325 = vld [vmem:[#allocation3 + $0x218] sm:$0xf]
    %v326 = vld [vmem:[#allocation3 + $0x21c] sm:$0xff]
    %v327 = vld [vmem:[#allocation3 + $0x224] sm:$0xf]
    %v328 = vld [vmem:[#allocation3 + $0x228] sm:$0xff]
    %v329 = vld [vmem:[#allocation3 + $0x230] sm:$0xf]
    %v330 = vld [vmem:[#allocation3 + $0x234] sm:$0xff]
    %v331 = vld [vmem:[#allocation3 + $0x23c] sm:$0xf]
    %v332 = vld [vmem:[#allocation3 + $0x240] sm:$0xff]
    %v333 = vld [vmem:[#allocation3 + $0x248] sm:$0xf]
    %v334 = vld [vmem:[#allocation3 + $0x24c] sm:$0xff]
    %v335 = vld [vmem:[#allocation3 + $0x254] sm:$0xf]
    %v336 = vld [vmem:[#allocation3 + $0x258] sm:$0xff]
    %v337 = vld [vmem:[#allocation3 + $0x260] sm:$0xf]
    %v338 = vld [vmem:[#allocation3 + $0x264] sm:$0xff]
    %v339 = vld [vmem:[#allocation3 + $0x26c] sm:$0xf]
    %v340 = vld [vmem:[#allocation3 + $0x270] sm:$0xff]
    %v341 = vld [vmem:[#allocation3 + $0x278] sm:$0xf]
    %v342 = vld [vmem:[#allocation3 + $0x27c] sm:$0xff]
    %v343 = vld [vmem:[#allocation3 + $0x284] sm:$0xf]
    %v344 = vld [vmem:[#allocation3 + $0x288] sm:$0xff]
    %v345 = vld [vmem:[#allocation3 + $0x290] sm:$0xf]
    %v346 = vld [vmem:[#allocation3 + $0x294] sm:$0xff]
    %v347 = vld [vmem:[#allocation3 + $0x29c] sm:$0xf]
    %v348 = vld [vmem:[#allocation3 + $0x2a0] sm:$0xff]
    %v349 = vld [vmem:[#allocation3 + $0x2a8] sm:$0xf]
    %v350 = vld [vmem:[#allocation3 + $0x2ac] sm:$0xff]
    %v351 = vld [vmem:[#allocation3 + $0x2b4] sm:$0xf]
    %v352 = vld [vmem:[#allocation3 + $0x2b8] sm:$0xff]
    %v353 = vld [vmem:[#allocation3 + $0x2c0] sm:$0xf]
    %v354 = vld [vmem:[#allocation3 + $0x2c4] sm:$0xff]
    %v355 = vld [vmem:[#allocation3 + $0x2cc] sm:$0xf]
    %v356 = vld [vmem:[#allocation3 + $0x2d0] sm:$0xff]
    %v357 = vld [vmem:[#allocation3 + $0x2d8] sm:$0xf]
    %v358 = vld [vmem:[#allocation3 + $0x2dc] sm:$0xff]
    %v359 = vld [vmem:[#allocation3 + $0x2e4] sm:$0xf]
    %v360 = vld [vmem:[#allocation3 + $0x2e8] sm:$0xff]
    %v361 = vld [vmem:[#allocation3 + $0x2f0] sm:$0xf]
    %v362 = vld [vmem:[#allocation3 + $0x2f4] sm:$0xff]
    %v363 = vld [vmem:[#allocation3 + $0x2fc] sm:$0xf]
    %v364 = vld [vmem:[%s4] sm:$0x7]
    %v366 = vlaneseq
    %v367 = vshrl.u32 %v366, 7
    %v368 = vsub.s32 0, %v367
    %v369 = vrot.slane %v364, %v368
    %v370 = vlaneseq
    %v371 = vshrl.u32 %v370, 7
    %v372 = vsub.s32 1, %v371
    %v373 = vrot.slane %v364, %v372
    %v374 = vlaneseq
    %v375 = vshrl.u32 %v374, 7
    %v376 = vsub.s32 2, %v375
    %v377 = vrot.slane %v364, %v376
    %v509 = vunpack.c.l.b16 %v236
    %v510 = vunpack.c.h.b16 %v236
    %v511 = vunpack.c.l.b16 %v237
    %v512 = vunpack.c.l.b16 %v238
    %v513 = vunpack.c.h.b16 %v238
    %v514 = vunpack.c.l.b16 %v239
    %v515 = vunpack.c.l.b16 %v240
    %v516 = vunpack.c.h.b16 %v240
    %v517 = vunpack.c.l.b16 %v241
    %v518 = vunpack.c.l.b16 %v242
    %v519 = vunpack.c.h.b16 %v242
    %v520 = vunpack.c.l.b16 %v243
    %v521 = vunpack.c.l.b16 %v244
    %v522 = vunpack.c.h.b16 %v244
    %v523 = vunpack.c.l.b16 %v245
    %v524 = vunpack.c.l.b16 %v246
    %v525 = vunpack.c.h.b16 %v246
    %v526 = vunpack.c.l.b16 %v247
    %v527 = vunpack.c.l.b16 %v248
    %v528 = vunpack.c.h.b16 %v248
    %v529 = vunpack.c.l.b16 %v249
    %v530 = vunpack.c.l.b16 %v250
    %v531 = vunpack.c.h.b16 %v250
    %v532 = vunpack.c.l.b16 %v251
    %v533 = vunpack.c.l.b16 %v252
    %v534 = vunpack.c.h.b16 %v252
    %v535 = vunpack.c.l.b16 %v253
    %v536 = vunpack.c.l.b16 %v254
    %v537 = vunpack.c.h.b16 %v254
    %v538 = vunpack.c.l.b16 %v255
    %v539 = vunpack.c.l.b16 %v256
    %v540 = vunpack.c.h.b16 %v256
    %v541 = vunpack.c.l.b16 %v257
    %v542 = vunpack.c.l.b16 %v258
    %v543 = vunpack.c.h.b16 %v258
    %v544 = vunpack.c.l.b16 %v259
    %v545 = vunpack.c.l.b16 %v260
    %v546 = vunpack.c.h.b16 %v260
    %v547 = vunpack.c.l.b16 %v261
    %v548 = vunpack.c.l.b16 %v262
    %v549 = vunpack.c.h.b16 %v262
    %v550 = vunpack.c.l.b16 %v263
    %v551 = vunpack.c.l.b16 %v264
    %v552 = vunpack.c.h.b16 %v264
    %v553 = vunpack.c.l.b16 %v265
    %v554 = vunpack.c.l.b16 %v266
    %v555 = vunpack.c.h.b16 %v266
    %v556 = vunpack.c.l.b16 %v267
    %v557 = vunpack.c.l.b16 %v268
    %v558 = vunpack.c.h.b16 %v268
    %v559 = vunpack.c.l.b16 %v269
    %v560 = vunpack.c.l.b16 %v270
    %v561 = vunpack.c.h.b16 %v270
    %v562 = vunpack.c.l.b16 %v271
    %v563 = vunpack.c.l.b16 %v272
    %v564 = vunpack.c.h.b16 %v272
    %v565 = vunpack.c.l.b16 %v273
    %v566 = vunpack.c.l.b16 %v274
    %v567 = vunpack.c.h.b16 %v274
    %v568 = vunpack.c.l.b16 %v275
    %v569 = vunpack.c.l.b16 %v276
    %v570 = vunpack.c.h.b16 %v276
    %v571 = vunpack.c.l.b16 %v277
    %v572 = vunpack.c.l.b16 %v278
    %v573 = vunpack.c.h.b16 %v278
    %v574 = vunpack.c.l.b16 %v279
    %v575 = vunpack.c.l.b16 %v280
    %v576 = vunpack.c.h.b16 %v280
    %v577 = vunpack.c.l.b16 %v281
    %v578 = vunpack.c.l.b16 %v282
    %v579 = vunpack.c.h.b16 %v282
    %v580 = vunpack.c.l.b16 %v283
    %v581 = vunpack.c.l.b16 %v284
    %v582 = vunpack.c.h.b16 %v284
    %v583 = vunpack.c.l.b16 %v285
    %v584 = vunpack.c.l.b16 %v286
    %v585 = vunpack.c.h.b16 %v286
    %v586 = vunpack.c.l.b16 %v287
    %v587 = vunpack.c.l.b16 %v288
    %v588 = vunpack.c.h.b16 %v288
    %v589 = vunpack.c.l.b16 %v289
    %v590 = vunpack.c.l.b16 %v290
    %v591 = vunpack.c.h.b16 %v290
    %v592 = vunpack.c.l.b16 %v291
    %v593 = vunpack.c.l.b16 %v292
    %v594 = vunpack.c.h.b16 %v292
    %v595 = vunpack.c.l.b16 %v293
    %v596 = vunpack.c.l.b16 %v294
    %v597 = vunpack.c.h.b16 %v294
    %v598 = vunpack.c.l.b16 %v295
    %v599 = vunpack.c.l.b16 %v296
    %v600 = vunpack.c.h.b16 %v296
    %v601 = vunpack.c.l.b16 %v297
    %v602 = vunpack.c.l.b16 %v298
    %v603 = vunpack.c.h.b16 %v298
    %v604 = vunpack.c.l.b16 %v299
    %v605 = vunpack.c.l.b16 %v300
    %v606 = vunpack.c.h.b16 %v300
    %v607 = vunpack.c.l.b16 %v301
    %v608 = vunpack.c.l.b16 %v302
    %v609 = vunpack.c.h.b16 %v302
    %v610 = vunpack.c.l.b16 %v303
    %v611 = vunpack.c.l.b16 %v304
    %v612 = vunpack.c.h.b16 %v304
    %v613 = vunpack.c.l.b16 %v305
    %v614 = vunpack.c.l.b16 %v306
    %v615 = vunpack.c.h.b16 %v306
    %v616 = vunpack.c.l.b16 %v307
    %v617 = vunpack.c.l.b16 %v308
    %v618 = vunpack.c.h.b16 %v308
    %v619 = vunpack.c.l.b16 %v309
    %v620 = vunpack.c.l.b16 %v310
    %v621 = vunpack.c.h.b16 %v310
    %v622 = vunpack.c.l.b16 %v311
    %v623 = vunpack.c.l.b16 %v312
    %v624 = vunpack.c.h.b16 %v312
    %v625 = vunpack.c.l.b16 %v313
    %v626 = vunpack.c.l.b16 %v314
    %v627 = vunpack.c.h.b16 %v314
    %v628 = vunpack.c.l.b16 %v315
    %v629 = vunpack.c.l.b16 %v316
    %v630 = vunpack.c.h.b16 %v316
    %v631 = vunpack.c.l.b16 %v317
    %v632 = vunpack.c.l.b16 %v318
    %v633 = vunpack.c.h.b16 %v318
    %v634 = vunpack.c.l.b16 %v319
    %v635 = vunpack.c.l.b16 %v320
    %v636 = vunpack.c.h.b16 %v320
    %v637 = vunpack.c.l.b16 %v321
    %v638 = vunpack.c.l.b16 %v322
    %v639 = vunpack.c.h.b16 %v322
    %v640 = vunpack.c.l.b16 %v323
    %v641 = vunpack.c.l.b16 %v324
    %v642 = vunpack.c.h.b16 %v324
    %v643 = vunpack.c.l.b16 %v325
    %v644 = vunpack.c.l.b16 %v326
    %v645 = vunpack.c.h.b16 %v326
    %v646 = vunpack.c.l.b16 %v327
    %v647 = vunpack.c.l.b16 %v328
    %v648 = vunpack.c.h.b16 %v328
    %v649 = vunpack.c.l.b16 %v329
    %v650 = vunpack.c.l.b16 %v330
    %v651 = vunpack.c.h.b16 %v330
    %v652 = vunpack.c.l.b16 %v331
    %v653 = vunpack.c.l.b16 %v332
    %v654 = vunpack.c.h.b16 %v332
    %v655 = vunpack.c.l.b16 %v333
    %v656 = vunpack.c.l.b16 %v334
    %v657 = vunpack.c.h.b16 %v334
    %v658 = vunpack.c.l.b16 %v335
    %v659 = vunpack.c.l.b16 %v336
    %v660 = vunpack.c.h.b16 %v336
    %v661 = vunpack.c.l.b16 %v337
    %v662 = vunpack.c.l.b16 %v338
    %v663 = vunpack.c.h.b16 %v338
    %v664 = vunpack.c.l.b16 %v339
    %v665 = vunpack.c.l.b16 %v340
    %v666 = vunpack.c.h.b16 %v340
    %v667 = vunpack.c.l.b16 %v341
    %v668 = vunpack.c.l.b16 %v342
    %v669 = vunpack.c.h.b16 %v342
    %v670 = vunpack.c.l.b16 %v343
    %v671 = vunpack.c.l.b16 %v344
    %v672 = vunpack.c.h.b16 %v344
    %v673 = vunpack.c.l.b16 %v345
    %v674 = vunpack.c.l.b16 %v346
    %v675 = vunpack.c.h.b16 %v346
    %v676 = vunpack.c.l.b16 %v347
    %v677 = vunpack.c.l.b16 %v348
    %v678 = vunpack.c.h.b16 %v348
    %v679 = vunpack.c.l.b16 %v349
    %v680 = vunpack.c.l.b16 %v350
    %v681 = vunpack.c.h.b16 %v350
    %v682 = vunpack.c.l.b16 %v351
    %v683 = vunpack.c.l.b16 %v352
    %v684 = vunpack.c.h.b16 %v352
    %v685 = vunpack.c.l.b16 %v353
    %v686 = vunpack.c.l.b16 %v354
    %v687 = vunpack.c.h.b16 %v354
    %v688 = vunpack.c.l.b16 %v355
    %v689 = vunpack.c.l.b16 %v356
    %v690 = vunpack.c.h.b16 %v356
    %v691 = vunpack.c.l.b16 %v357
    %v692 = vunpack.c.l.b16 %v358
    %v693 = vunpack.c.h.b16 %v358
    %v694 = vunpack.c.l.b16 %v359
    %v695 = vunpack.c.l.b16 %v360
    %v696 = vunpack.c.h.b16 %v360
    %v697 = vunpack.c.l.b16 %v361
    %v698 = vunpack.c.l.b16 %v362
    %v699 = vunpack.c.h.b16 %v362
    %v700 = vunpack.c.l.b16 %v363
    %v701 = vpack.c.b16 %v512, %v509
    %v702 = vpack.c.b16 %v513, %v510
    %v703 = vpack.c.b16 %v514, %v511
    %v704 = vpack.c.b16 %v518, %v515
    %v705 = vpack.c.b16 %v519, %v516
    %v706 = vpack.c.b16 %v520, %v517
    %v707 = vpack.c.b16 %v524, %v521
    %v708 = vpack.c.b16 %v525, %v522
    %v709 = vpack.c.b16 %v526, %v523
    %v710 = vpack.c.b16 %v530, %v527
    %v711 = vpack.c.b16 %v531, %v528
    %v712 = vpack.c.b16 %v532, %v529
    %v713 = vpack.c.b16 %v536, %v533
    %v714 = vpack.c.b16 %v537, %v534
    %v715 = vpack.c.b16 %v538, %v535
    %v716 = vpack.c.b16 %v542, %v539
    %v717 = vpack.c.b16 %v543, %v540
    %v718 = vpack.c.b16 %v544, %v541
    %v719 = vpack.c.b16 %v548, %v545
    %v720 = vpack.c.b16 %v549, %v546
    %v721 = vpack.c.b16 %v550, %v547
    %v722 = vpack.c.b16 %v554, %v551
    %v723 = vpack.c.b16 %v555, %v552
    %v724 = vpack.c.b16 %v556, %v553
    %v725 = vpack.c.b16 %v560, %v557
    %v726 = vpack.c.b16 %v561, %v558
    %v727 = vpack.c.b16 %v562, %v559
    %v728 = vpack.c.b16 %v566, %v563
    %v729 = vpack.c.b16 %v567, %v564
    %v730 = vpack.c.b16 %v568, %v565
    %v731 = vpack.c.b16 %v572, %v569
    %v732 = vpack.c.b16 %v573, %v570
    %v733 = vpack.c.b16 %v574, %v571
    %v734 = vpack.c.b16 %v578, %v575
    %v735 = vpack.c.b16 %v579, %v576
    %v736 = vpack.c.b16 %v580, %v577
    %v737 = vpack.c.b16 %v584, %v581
    %v738 = vpack.c.b16 %v585, %v582
    %v739 = vpack.c.b16 %v586, %v583
    %v740 = vpack.c.b16 %v590, %v587
    %v741 = vpack.c.b16 %v591, %v588
    %v742 = vpack.c.b16 %v592, %v589
    %v743 = vpack.c.b16 %v596, %v593
    %v744 = vpack.c.b16 %v597, %v594
    %v745 = vpack.c.b16 %v598, %v595
    %v746 = vpack.c.b16 %v602, %v599
    %v747 = vpack.c.b16 %v603, %v600
    %v748 = vpack.c.b16 %v604, %v601
    %v749 = vpack.c.b16 %v608, %v605
    %v750 = vpack.c.b16 %v609, %v606
    %v751 = vpack.c.b16 %v610, %v607
    %v752 = vpack.c.b16 %v614, %v611
    %v753 = vpack.c.b16 %v615, %v612
    %v754 = vpack.c.b16 %v616, %v613
    %v755 = vpack.c.b16 %v620, %v617
    %v756 = vpack.c.b16 %v621, %v618
    %v757 = vpack.c.b16 %v622, %v619
    %v758 = vpack.c.b16 %v626, %v623
    %v759 = vpack.c.b16 %v627, %v624
    %v760 = vpack.c.b16 %v628, %v625
    %v761 = vpack.c.b16 %v632, %v629
    %v762 = vpack.c.b16 %v633, %v630
    %v763 = vpack.c.b16 %v634, %v631
    %v764 = vpack.c.b16 %v638, %v635
    %v765 = vpack.c.b16 %v639, %v636
    %v766 = vpack.c.b16 %v640, %v637
    %v767 = vpack.c.b16 %v644, %v641
    %v768 = vpack.c.b16 %v645, %v642
    %v769 = vpack.c.b16 %v646, %v643
    %v770 = vpack.c.b16 %v650, %v647
    %v771 = vpack.c.b16 %v651, %v648
    %v772 = vpack.c.b16 %v652, %v649
    %v773 = vpack.c.b16 %v656, %v653
    %v774 = vpack.c.b16 %v657, %v654
    %v775 = vpack.c.b16 %v658, %v655
    %v776 = vpack.c.b16 %v662, %v659
    %v777 = vpack.c.b16 %v663, %v660
    %v778 = vpack.c.b16 %v664, %v661
    %v779 = vpack.c.b16 %v668, %v665
    %v780 = vpack.c.b16 %v669, %v666
    %v781 = vpack.c.b16 %v670, %v667
    %v782 = vpack.c.b16 %v674, %v671
    %v783 = vpack.c.b16 %v675, %v672
    %v784 = vpack.c.b16 %v676, %v673
    %v785 = vpack.c.b16 %v680, %v677
    %v786 = vpack.c.b16 %v681, %v678
    %v787 = vpack.c.b16 %v682, %v679
    %v788 = vpack.c.b16 %v686, %v683
    %v789 = vpack.c.b16 %v687, %v684
    %v790 = vpack.c.b16 %v688, %v685
    %v791 = vpack.c.b16 %v692, %v689
    %v792 = vpack.c.b16 %v693, %v690
    %v793 = vpack.c.b16 %v694, %v691
    %v794 = vpack.c.b16 %v698, %v695
    %v795 = vpack.c.b16 %v699, %v696
    %v796 = vpack.c.b16 %v700, %v697
    %893 = vmatprep.subr.bf16.mxu0 %v723
    %894 = vmatpush1.bf16.msra.mxu0 %v722
    %895 = vmatprep.subr.bf16.mxu0 %v720
    %896 = vmatpush1.bf16.msra.mxu0 %v719
    %897 = vmatprep.subr.bf16.mxu0 %v717
    %898 = vmatpush1.bf16.msra.mxu0 %v716
    %899 = vmatprep.subr.bf16.mxu0 %v714
    %900 = vmatpush1.bf16.msra.mxu0 %v713
    %901 = vmatprep.subr.bf16.mxu0 %v711
    %902 = vmatpush1.bf16.msra.mxu0 %v710
    %903 = vmatprep.subr.bf16.mxu0 %v708
    %904 = vmatpush1.bf16.msra.mxu0 %v707
    %905 = vmatprep.subr.bf16.mxu0 %v705
    %906 = vmatpush1.bf16.msra.mxu0 %v704
    %907 = vmatprep.subr.bf16.mxu0 %v702
    %908 = vmatpush1.bf16.msra.mxu0 %v701
    %909 = vmatprep.subr.bf16.mxu0 %v747
    %910 = vmatpush2.bf16.msra.mxu0 %v746
    %911 = vmatprep.subr.bf16.mxu0 %v744
    %912 = vmatpush2.bf16.msra.mxu0 %v743
    %913 = vmatprep.subr.bf16.mxu0 %v741
    %914 = vmatpush2.bf16.msra.mxu0 %v740
    %915 = vmatprep.subr.bf16.mxu0 %v738
    %916 = vmatpush2.bf16.msra.mxu0 %v737
    %917 = vmatprep.subr.bf16.mxu0 %v735
    %918 = vmatpush2.bf16.msra.mxu0 %v734
    %919 = vmatprep.subr.bf16.mxu0 %v732
    %920 = vmatpush2.bf16.msra.mxu0 %v731
    %921 = vmatprep.subr.bf16.mxu0 %v729
    %922 = vmatpush2.bf16.msra.mxu0 %v728
    %923 = vmatprep.subr.bf16.mxu0 %v726
    %924 = vmatpush2.bf16.msra.mxu0 %v725
    %925 = vmatprep.mubr.bf16.mxu0 %v233
    %926 = vmatmul.mubr.bf16.gmra.mxu0 %v232
    %v927 = vpop.f32.mrf.mxu0
    %v928 = vadd.f32 %v369, %v927
    %v929 = vpop.f32.mrf.mxu0
    %v930 = vadd.f32 %v373, %v929
    %v931 = vpop.f32.mrf.mxu0
    %v932 = vpop.f32.mrf.mxu0
    %933 = vdwg.mxu0
    %934 = vmatprep.subr.bf16.mxu0 %v771
    %935 = vmatpush1.bf16.msra.mxu0 %v770
    %936 = vmatprep.subr.bf16.mxu0 %v768
    %937 = vmatpush1.bf16.msra.mxu0 %v767
    %938 = vmatprep.subr.bf16.mxu0 %v765
    %939 = vmatpush1.bf16.msra.mxu0 %v764
    %940 = vmatprep.subr.bf16.mxu0 %v762
    %941 = vmatpush1.bf16.msra.mxu0 %v761
    %942 = vmatprep.subr.bf16.mxu0 %v759
    %943 = vmatpush1.bf16.msra.mxu0 %v758
    %944 = vmatprep.subr.bf16.mxu0 %v756
    %945 = vmatpush1.bf16.msra.mxu0 %v755
    %946 = vmatprep.subr.bf16.mxu0 %v753
    %947 = vmatpush1.bf16.msra.mxu0 %v752
    %948 = vmatprep.subr.bf16.mxu0 %v750
    %949 = vmatpush1.bf16.msra.mxu0 %v749
    %950 = vmatprep.subr.bf16.mxu0 %v795
    %951 = vmatpush2.bf16.msra.mxu0 %v794
    %952 = vmatprep.subr.bf16.mxu0 %v792
    %953 = vmatpush2.bf16.msra.mxu0 %v791
    %954 = vmatprep.subr.bf16.mxu0 %v789
    %955 = vmatpush2.bf16.msra.mxu0 %v788
    %956 = vmatprep.subr.bf16.mxu0 %v786
    %957 = vmatpush2.bf16.msra.mxu0 %v785
    %958 = vmatprep.subr.bf16.mxu0 %v783
    %959 = vmatpush2.bf16.msra.mxu0 %v782
    %960 = vmatprep.subr.bf16.mxu0 %v780
    %961 = vmatpush2.bf16.msra.mxu0 %v779
    %962 = vmatprep.subr.bf16.mxu0 %v777
    %963 = vmatpush2.bf16.msra.mxu0 %v776
    %964 = vmatprep.subr.bf16.mxu0 %v774
    %965 = vmatpush2.bf16.msra.mxu0 %v773
    %966 = vmatprep.mubr.bf16.mxu0 %v235
    %967 = vmatmul.mubr.bf16.gmra.mxu0 %v234
    %v968 = vpop.f32.mrf.mxu0
    %v969 = vadd.f32 %v928, %v968
    %v970 = vpop.f32.mrf.mxu0
    %v971 = vadd.f32 %v930, %v970
    %v972 = vpop.f32.mrf.mxu0
    %v973 = vpop.f32.mrf.mxu0
    %974 = vdwg.mxu0
    %975 = vmatprep.subr.bf16.mxu0 0
    %976 = vmatpush1.bf16.msra.mxu0 %v724
    %977 = vmatprep.subr.bf16.mxu0 0
    %978 = vmatpush1.bf16.msra.mxu0 %v721
    %979 = vmatprep.subr.bf16.mxu0 0
    %980 = vmatpush1.bf16.msra.mxu0 %v718
    %981 = vmatprep.subr.bf16.mxu0 0
    %982 = vmatpush1.bf16.msra.mxu0 %v715
    %983 = vmatprep.subr.bf16.mxu0 0
    %984 = vmatpush1.bf16.msra.mxu0 %v712
    %985 = vmatprep.subr.bf16.mxu0 0
    %986 = vmatpush1.bf16.msra.mxu0 %v709
    %987 = vmatprep.subr.bf16.mxu0 0
    %988 = vmatpush1.bf16.msra.mxu0 %v706
    %989 = vmatprep.subr.bf16.mxu0 0
    %990 = vmatpush1.bf16.msra.mxu0 %v703
    %991 = vmatprep.subr.bf16.mxu0 0
    %992 = vmatpush2.bf16.msra.mxu0 %v748
    %993 = vmatprep.subr.bf16.mxu0 0
    %994 = vmatpush2.bf16.msra.mxu0 %v745
    %995 = vmatprep.subr.bf16.mxu0 0
    %996 = vmatpush2.bf16.msra.mxu0 %v742
    %997 = vmatprep.subr.bf16.mxu0 0
    %998 = vmatpush2.bf16.msra.mxu0 %v739
    %999 = vmatprep.subr.bf16.mxu0 0
    %1000 = vmatpush2.bf16.msra.mxu0 %v736
    %1001 = vmatprep.subr.bf16.mxu0 0
    %1002 = vmatpush2.bf16.msra.mxu0 %v733
    %1003 = vmatprep.subr.bf16.mxu0 0
    %1004 = vmatpush2.bf16.msra.mxu0 %v730
    %1005 = vmatprep.subr.bf16.mxu0 0
    %1006 = vmatpush2.bf16.msra.mxu0 %v727
    %1007 = vmatprep.mubr.bf16.mxu0 %v233
    %1008 = vmatmul.mubr.bf16.gmra.mxu0 %v232
    %v1009 = vpop.f32.mrf.mxu0
    %v1010 = vadd.f32 %v377, %v1009
    %v1011 = vpop.f32.mrf.mxu0
    %v1012 = vpop.f32.mrf.mxu0
    %v1013 = vpop.f32.mrf.mxu0
    %1014 = vdwg.mxu0
    %1015 = vmatprep.subr.bf16.mxu0 0
    %1016 = vmatpush1.bf16.msra.mxu0 %v772
    %1017 = vmatprep.subr.bf16.mxu0 0
    %1018 = vmatpush1.bf16.msra.mxu0 %v769
    %1019 = vmatprep.subr.bf16.mxu0 0
    %1020 = vmatpush1.bf16.msra.mxu0 %v766
    %1021 = vmatprep.subr.bf16.mxu0 0
    %1022 = vmatpush1.bf16.msra.mxu0 %v763
    %1023 = vmatprep.subr.bf16.mxu0 0
    %1024 = vmatpush1.bf16.msra.mxu0 %v760
    %1025 = vmatprep.subr.bf16.mxu0 0
    %1026 = vmatpush1.bf16.msra.mxu0 %v757
    %1027 = vmatprep.subr.bf16.mxu0 0
    %1028 = vmatpush1.bf16.msra.mxu0 %v754
    %1029 = vmatprep.subr.bf16.mxu0 0
    %1030 = vmatpush1.bf16.msra.mxu0 %v751
    %1031 = vmatprep.subr.bf16.mxu0 0
    %1032 = vmatpush2.bf16.msra.mxu0 %v796
    %1033 = vmatprep.subr.bf16.mxu0 0
    %1034 = vmatpush2.bf16.msra.mxu0 %v793
    %1035 = vmatprep.subr.bf16.mxu0 0
    %1036 = vmatpush2.bf16.msra.mxu0 %v790
    %1037 = vmatprep.subr.bf16.mxu0 0
    %1038 = vmatpush2.bf16.msra.mxu0 %v787
    %1039 = vmatprep.subr.bf16.mxu0 0
    %1040 = vmatpush2.bf16.msra.mxu0 %v784
    %1041 = vmatprep.subr.bf16.mxu0 0
    %1042 = vmatpush2.bf16.msra.mxu0 %v781
    %1043 = vmatprep.subr.bf16.mxu0 0
    %1044 = vmatpush2.bf16.msra.mxu0 %v778
    %1045 = vmatprep.subr.bf16.mxu0 0
    %1046 = vmatpush2.bf16.msra.mxu0 %v775
    %1047 = vmatprep.mubr.bf16.mxu0 %v235
    %1048 = vmatmul.mubr.bf16.gmra.mxu0 %v234
    %v1049 = vpop.f32.mrf.mxu0
    %v1050 = vadd.f32 %v1010, %v1049
    %v1051 = vpop.f32.mrf.mxu0
    %v1052 = vpop.f32.mrf.mxu0
    %v1053 = vpop.f32.mrf.mxu0
    %1054 = vdwg.mxu0
    %v1055 = vmax.f32 %v969, 0.0
    %v1056 = vmax.f32 %v971, 0.0
    %v1057 = vmax.f32 %v1050, 0.0
    %v1058 = vld [vmem:[%s5] sm:$0x7]
    %v1060 = vlaneseq
    %v1061 = vshrl.u32 %v1060, 7
    %v1062 = vsub.s32 0, %v1061
    %v1063 = vrot.slane %v1058, %v1062
    %v1064 = vlaneseq
    %v1065 = vshrl.u32 %v1064, 7
    %v1066 = vsub.s32 1, %v1065
    %v1067 = vrot.slane %v1058, %v1066
    %v1068 = vlaneseq
    %v1069 = vshrl.u32 %v1068, 7
    %v1070 = vsub.s32 2, %v1069
    %v1071 = vrot.slane %v1058, %v1070
    %v1075 = vmul.f32 %v1055, %v1063
    %v1076 = vmul.f32 %v1056, %v1067
    %v1077 = vmul.f32 %v1057, %v1071
    %v1078 = vadd.f32 %v1075, %v1076
    %v1079 = vadd.f32 %v1078, %v1077
    %1080 = vadd.xlane.f32.xlu0 %v1079
    %v1081 = vpop.xlane.xlu0 %1080
    %v1082 = vld [vmem:[#allocation2] sm:$0x1]
    %s1083 = vtos %v1082
    %v1084 = vstv %s1083
    %v1085 = vadd.f32 %v1081, %v1084
    %v1087 = vlaneseq
    %v1088 = vand.u32 %v1087, 127
    %v1089 = vlaneseq
    %v1090 = vshrl.u32 %v1089, 7
    %v1091 = vsub.s32 %v1088, %v1090
    %v1092 = vrot.slane %v1085, %v1091
    %vm1094 = vcmask 57344
    %1095 = vst.msk [vmem:[#allocation6] sm:$0x1] %vm1094, %v1092
    // Predicated region
    $region34: #{state_action_to_qvalue.1} parent=1 // pred_check
      _
    $region35: #{state_action_to_qvalue.1} parent=1 // pred_check_branch
      %1097 = sbr.rel (0) target = $region37
    $region36: #{state_action_to_qvalue.1} parent=1 // pred_region
      %s1099 = ssub.s32 16, 16
      %1100 = vsyncadd [#allocation5], %s1099
      %s1102 = sshll.u32 [#allocation6], 4
      %s1103 = int_to_ptr.vmem [resolvable:$true] %s1102
      %1105 = dma.vmem_to_hbm [thread:$0]  %s1103, 16, %s7, [#allocation5]
    $region37: #{state_action_to_qvalue.1} parent=1 // pred_fallthru
      _
    // Predicated region
    $region38: #{state_action_to_qvalue.1} parent=1 // pred_check
      _
    $region39: #{state_action_to_qvalue.1} parent=1 // pred_check_branch
      %1107 = sbr.rel (0) target = $region41
    $region40: #{state_action_to_qvalue.1} parent=1 // pred_region
      %1108 = dma.done [#allocation5], 16
    $region41: #{state_action_to_qvalue.1} parent=1 // pred_fallthru
      _
    %1109 = vsyncpa [#allocation4], 1
    %1110 = vsyncpa [#allocation5], 1

</llo_original>
